<compile_context>
chip_gen: v7x
topology: tpu7x:2x2x1
jax: 0.10.0
libtpu: 0.0.40
codegen_flags: <defaults>
</compile_context>

<pallas_src>
import jax
import jax.numpy as jnp
import numpy as np
from jax.experimental import pallas as pl
from jax.experimental.pallas import tpu as pltpu


# ----------------------------------------------------------------------------
# Kernel
# ----------------------------------------------------------------------------
def _transition_kernel(xp_ref, scale_ref, bias_ref, w_ref, o_ref):
    # xp_ref:    (4, tm, Cin)  -- packed 2x2-window corners (k = ph*2 + pw)
    # scale_ref: (1, Cin) f32  -- folded BN scale  (gamma / sqrt(var + eps))
    # bias_ref:  (1, Cin) f32  -- folded BN bias   (beta - mean * scale)
    # w_ref:     (Cin, Coutp)  -- 1x1 conv weight, transposed, *0.25 folded
    # o_ref:     (tm, Coutp)   -- pooled output
    scale = scale_ref[...]
    bias = bias_ref[...]

    def bn_relu(k):
        x = xp_ref[k].astype(jnp.float32)            # no-op for f32, upcast for bf16
        return jnp.maximum(x * scale + bias, 0.0)    # BN + ReLU on the VPU

    # 2x2 avg-pool and 1x1 conv are both linear, so they commute: sum the four
    # window pixels first, then do ONE MXU matmul (1/4 factor folded into w).
    pooled = bn_relu(0) + bn_relu(1) + bn_relu(2) + bn_relu(3)   # (tm, Cin)
    o_ref[...] = jnp.dot(pooled, w_ref[...].astype(jnp.float32),
                         preferred_element_type=jnp.float32).astype(o_ref.dtype)


# ----------------------------------------------------------------------------
# Tiling / VMEM helpers
# ----------------------------------------------------------------------------
def _vmem_params():
    """Generation-aware VMEM limit + tiling budget."""
    cap = 64 * 1024 * 1024                      # conservative fallback (fits v7x)
    try:
        cap = int(getattr(pltpu.get_tpu_info(), "vmem_capacity_bytes", cap))
    except Exception:
        pass
    limit = min(int(0.75 * cap), 100 * 1024 * 1024)   # ~96 MiB v5e/v6e, ~48 MiB v7x
    budget = int(0.6 * limit)                          # headroom for compiler scratch
    return limit, budget


def _pick_row_tile(m, cin, coutp, in_itemsize, target, budget):
    """Pick a row tile tm (multiple of 8).  Returns (tm, grid); the caller pads
    M up to tm*grid when it is not an exact divisor.

    Preference: exact divisors giving an even grid of >= 4 steps (v7x megacore
    balance + pipeline fill/drain amortization on v5e/v6e), then >= 2 steps,
    then any divisor, then the largest budget-fitting tile with a padded tail.
    Within a class the largest tile wins (fat DMAs amortize the ~600-cycle
    per-step overhead).
    """
    def fits(t):
        # double-buffered input block (4, t, cin) and output block (t, coutp),
        # plus resident w / scale / bias (counted double-buffered: we do not
        # force pl.Buffered(1) on the constant-index operands).
        blk = 2 * (4 * t * cin * in_itemsize + t * coutp * 4)
        resident = 2 * (cin * coutp * in_itemsize + 2 * cin * 4)
        return blk + resident <= budget

    target = max(8, (min(target, max(m, 8)) // 8) * 8)
    divisors = [t for t in range(8, target + 1, 8) if m % t == 0 and fits(t)]
    for pred in (lambda g: g >= 4 and g % 2 == 0,
                 lambda g: g >= 2,
                 lambda g: True):
        sel = [t for t in divisors if pred(m // t)]
        if sel:
            tm = max(sel)
            return tm, m // tm

    # No divisor fits the budget: pad M up to a multiple of the largest
    # budget-fitting tile (replaces the old single-full-block fallback).
    tm = 8
    while tm + 8 <= target and fits(tm + 8):
        tm += 8
    return tm, -(-m // tm)


# ----------------------------------------------------------------------------
# Wrapper
# ----------------------------------------------------------------------------
def transition_pallas(x, gamma, beta, conv_weight, eps=1e-5,
                      block_rows=2048, use_bf16_inputs=False):
    """x: (N, Cin, H, W) float32 (NCHW, like PyTorch).
    Returns (N, Cout, H//2, W//2) float32.

    use_bf16_inputs: store the packed corners and the folded weight in bf16 in
    HBM (halves the memory-bound kernel's input traffic on v5e/v6e/v7x) while
    keeping all compute/accumulation in f32 in-kernel.  Off by default to
    preserve the module's f32 numerics (~1e-4 tolerance).
    """
    N, Cin, H, W = x.shape
    Cout = conv_weight.shape[0]
    assert H % 2 == 0 and W % 2 == 0, "spatial dims must be even for 2x2 pool"
    Hh, Wh = H // 2, W // 2
    M = N * Hh * Wh

    xf = x.astype(jnp.float32)

    # --- ONE fused packed-corner transpose: (4, M, Cin), corner k = ph*2+pw ---
    xp = xf.reshape(N, Cin, Hh, 2, Wh, 2)
    xp = jnp.transpose(xp, (3, 5, 0, 2, 4, 1)).reshape(4, M, Cin)

    # --- BatchNorm batch statistics (training-mode forward) computed from the
    #     packed array (a permutation of x, so sums are identical); variance is
    #     mean-subtracted for numerical stability. ---
    # TODO(synk): the GBN class is not provided in the spec; modeled here as a
    # plain full-batch BatchNorm forward (no virtual-batch / ghost splitting,
    # no running-stat updates).
    mean = jnp.mean(xp, axis=(0, 1))                              # (Cin,)
    var = jnp.mean(jnp.square(xp - mean[None, None, :]), axis=(0, 1))
    scale = gamma.astype(jnp.float32) / jnp.sqrt(var + eps)
    bias = beta.astype(jnp.float32) - mean * scale
    scale2d = scale.reshape(1, Cin)
    bias2d = bias.reshape(1, Cin)

    # --- Output-channel padding policy: only pad to a lane-dense multiple of
    #     128 when the byte amplification is small; small Cout keeps the exact
    #     width (masked vst beats 32x write amplification). ---
    if Cout % 128 == 0:
        Coutp = Cout
    elif Cout >= 96:
        Coutp = ((Cout + 127) // 128) * 128
    else:
        Coutp = Cout

    # --- 1x1 conv weight: (Cout,Cin,1,1) -> (Cin,Coutp), 0.25 pool factor folded ---
    w = conv_weight[:, :, 0, 0].astype(jnp.float32).T * 0.25      # (Cin, Cout)
    if Coutp != Cout:
        w = jnp.pad(w, ((0, 0), (0, Coutp - Cout)))

    in_dtype = jnp.bfloat16 if use_bf16_inputs else jnp.float32
    in_itemsize = 2 if use_bf16_inputs else 4
    xp = xp.astype(in_dtype)
    w = w.astype(in_dtype)

    # --- generation-aware tiling ---
    vmem_limit, budget = _vmem_params()
    tm, grid = _pick_row_tile(M, Cin, Coutp, in_itemsize, block_rows, budget)
    Mp = tm * grid
    if Mp != M:
        xp = jnp.pad(xp, ((0, 0), (0, Mp - M), (0, 0)))   # padded rows sliced off below

    out_flat = pl.pallas_call(
        _transition_kernel,
        out_shape=jax.ShapeDtypeStruct((Mp, Coutp), jnp.float32),
        grid_spec=pltpu.PrefetchScalarGridSpec(
            num_scalar_prefetch=0,
            grid=(grid,),
            in_specs=[
                pl.BlockSpec((4, tm, Cin), lambda i: (0, i, 0)),   # packed corners
                pl.BlockSpec((1, Cin), lambda i: (0, 0)),          # BN scale
                pl.BlockSpec((1, Cin), lambda i: (0, 0)),          # BN bias
                pl.BlockSpec((Cin, Coutp), lambda i: (0, 0)),      # folded weight
            ],
            out_specs=pl.BlockSpec((tm, Coutp), lambda i: (i, 0)),
        ),
        compiler_params=pltpu.CompilerParams(
            dimension_semantics=("parallel",),
            vmem_limit_bytes=vmem_limit,
        ),
        cost_estimate=pl.CostEstimate(
            flops=2 * Mp * Cin * Coutp + 16 * Mp * Cin,
            transcendentals=0,
            bytes_accessed=(in_itemsize * (4 * Mp * Cin + Cin * Coutp)
                            + 4 * Mp * Coutp + 4 * 2 * Cin),
        ),
    )(xp, scale2d, bias2d, w)

    # --- back to NCHW, dropping row/lane padding ---
    out = out_flat[:M, :Cout].reshape(N, Hh, Wh, Cout)
    return jnp.transpose(out, (0, 3, 1, 2))               # (N, Cout, H//2, W//2)


# ----------------------------------------------------------------------------
# Pure-JAX reference (mirrors the PyTorch forward, training-mode BN)
# ----------------------------------------------------------------------------
def transition_reference(x, gamma, beta, conv_weight, eps=1e-5):
    mean = jnp.mean(x, axis=(0, 2, 3), keepdims=True)
    var = jnp.var(x, axis=(0, 2, 3), keepdims=True)
    xhat = (x - mean) / jnp.sqrt(var + eps)
    y = gamma[None, :, None, None] * xhat + beta[None, :, None, None]
    y = jnp.maximum(y, 0.0)
    out = jax.lax.conv_general_dilated(
        y, conv_weight, window_strides=(1, 1), padding="VALID",
        dimension_numbers=("NCHW", "OIHW", "NCHW"))
    out = jax.lax.reduce_window(
        out, 0.0, jax.lax.add,
        window_dimensions=(1, 1, 2, 2), window_strides=(1, 1, 2, 2),
        padding="VALID") / 4.0
    return out


if __name__ == "__main__":
    key = jax.random.PRNGKey(0)
    k_x, k_g, k_b, k_w = jax.random.split(key, 4)

    # Module config:  Transition_GBN(in_planes=8, out_planes=4)
    N, Cin, Hs, Ws = 2, 8, 16, 16
    Cout = 4

    x = jax.random.normal(k_x, (N, Cin, Hs, Ws), dtype=jnp.float32)
    gamma = 1.0 + 0.1 * jax.random.normal(k_g, (Cin,), dtype=jnp.float32)
    beta = 0.1 * jax.random.normal(k_b, (Cin,), dtype=jnp.float32)
    conv_weight = (jax.random.normal(k_w, (Cout, Cin, 1, 1), dtype=jnp.float32)
                   * (1.0 / np.sqrt(Cin)))

    run = jax.jit(transition_pallas)
    out = jax.block_until_ready(run(x, gamma, beta, conv_weight))

    ref = jax.block_until_ready(
        jax.jit(transition_reference)(x, gamma, beta, conv_weight))

    assert out.shape == (N, Cout, Hs // 2, Ws // 2), out.shape
    np.testing.assert_allclose(np.asarray(out), np.asarray(ref),
                               rtol=1e-4, atol=1e-4)
    print("KERNEL_OK")
</pallas_src>

<mosaic_0001>
module attributes {stable_mosaic.version = 11 : i64} {
  func.func @_transition_kernel(%arg0: i32, %arg1: memref<4x32x8xf32, #tpu.memory_space<vmem>>, %arg2: memref<1x8xf32, #tpu.memory_space<vmem>>, %arg3: memref<1x8xf32, #tpu.memory_space<vmem>>, %arg4: memref<8x4xf32, #tpu.memory_space<vmem>>, %arg5: memref<32x4xf32, #tpu.memory_space<vmem>>) attributes {dimension_semantics = [#tpu.dimension_semantics<parallel>], iteration_bounds = array<i64: 4>, scalar_prefetch = 0 : i64, scratch_operands = 0 : i64, tpu.core_type = #tpu.core_type<tc>, window_params = [{transform_indices = @transform_0, window_bounds = array<i64: 4, 32, 8>}, {pipeline_mode = #tpu.pipeline_mode<synchronous>, transform_indices = @transform_1, window_bounds = array<i64: 1, 8>}, {pipeline_mode = #tpu.pipeline_mode<synchronous>, transform_indices = @transform_2, window_bounds = array<i64: 1, 8>}, {pipeline_mode = #tpu.pipeline_mode<synchronous>, transform_indices = @transform_3, window_bounds = array<i64: 8, 4>}, {transform_indices = @transform_4, window_bounds = array<i64: 32, 4>}]} {
    %c0 = arith.constant 0 : index
    %c0_0 = arith.constant 0 : index
    %0 = vector.load %arg2[%c0, %c0_0] : memref<1x8xf32, #tpu.memory_space<vmem>>, vector<1x8xf32>
    %c0_1 = arith.constant 0 : index
    %c0_2 = arith.constant 0 : index
    %1 = vector.load %arg3[%c0_1, %c0_2] : memref<1x8xf32, #tpu.memory_space<vmem>>, vector<1x8xf32>
    %c0_3 = arith.constant 0 : index
    %c0_4 = arith.constant 0 : index
    %c0_5 = arith.constant 0 : index
    %2 = vector.load %arg1[%c0_3, %c0_4, %c0_5] : memref<4x32x8xf32, #tpu.memory_space<vmem>>, vector<1x32x8xf32>
    %3 = vector.shape_cast %2 : vector<1x32x8xf32> to vector<32x8xf32>
    %4 = vector.broadcast %0 : vector<1x8xf32> to vector<32x8xf32>
    %5 = arith.mulf %3, %4 : vector<32x8xf32>
    %6 = vector.broadcast %1 : vector<1x8xf32> to vector<32x8xf32>
    %7 = arith.addf %5, %6 : vector<32x8xf32>
    %cst = arith.constant 0.000000e+00 : f32
    %8 = vector.broadcast %cst : f32 to vector<32x8xf32>
    %9 = arith.maximumf %7, %8 : vector<32x8xf32>
    %c1 = arith.constant 1 : index
    %c0_6 = arith.constant 0 : index
    %c0_7 = arith.constant 0 : index
    %10 = vector.load %arg1[%c1, %c0_6, %c0_7] : memref<4x32x8xf32, #tpu.memory_space<vmem>>, vector<1x32x8xf32>
    %11 = vector.shape_cast %10 : vector<1x32x8xf32> to vector<32x8xf32>
    %12 = vector.broadcast %0 : vector<1x8xf32> to vector<32x8xf32>
    %13 = arith.mulf %11, %12 : vector<32x8xf32>
    %14 = vector.broadcast %1 : vector<1x8xf32> to vector<32x8xf32>
    %15 = arith.addf %13, %14 : vector<32x8xf32>
    %cst_8 = arith.constant 0.000000e+00 : f32
    %16 = vector.broadcast %cst_8 : f32 to vector<32x8xf32>
    %17 = arith.maximumf %15, %16 : vector<32x8xf32>
    %18 = arith.addf %9, %17 : vector<32x8xf32>
    %c2 = arith.constant 2 : index
    %c0_9 = arith.constant 0 : index
    %c0_10 = arith.constant 0 : index
    %19 = vector.load %arg1[%c2, %c0_9, %c0_10] : memref<4x32x8xf32, #tpu.memory_space<vmem>>, vector<1x32x8xf32>
    %20 = vector.shape_cast %19 : vector<1x32x8xf32> to vector<32x8xf32>
    %21 = vector.broadcast %0 : vector<1x8xf32> to vector<32x8xf32>
    %22 = arith.mulf %20, %21 : vector<32x8xf32>
    %23 = vector.broadcast %1 : vector<1x8xf32> to vector<32x8xf32>
    %24 = arith.addf %22, %23 : vector<32x8xf32>
    %cst_11 = arith.constant 0.000000e+00 : f32
    %25 = vector.broadcast %cst_11 : f32 to vector<32x8xf32>
    %26 = arith.maximumf %24, %25 : vector<32x8xf32>
    %27 = arith.addf %18, %26 : vector<32x8xf32>
    %c3 = arith.constant 3 : index
    %c0_12 = arith.constant 0 : index
    %c0_13 = arith.constant 0 : index
    %28 = vector.load %arg1[%c3, %c0_12, %c0_13] : memref<4x32x8xf32, #tpu.memory_space<vmem>>, vector<1x32x8xf32>
    %29 = vector.shape_cast %28 : vector<1x32x8xf32> to vector<32x8xf32>
    %30 = vector.broadcast %0 : vector<1x8xf32> to vector<32x8xf32>
    %31 = arith.mulf %29, %30 : vector<32x8xf32>
    %32 = vector.broadcast %1 : vector<1x8xf32> to vector<32x8xf32>
    %33 = arith.addf %31, %32 : vector<32x8xf32>
    %cst_14 = arith.constant 0.000000e+00 : f32
    %34 = vector.broadcast %cst_14 : f32 to vector<32x8xf32>
    %35 = arith.maximumf %33, %34 : vector<32x8xf32>
    %36 = arith.addf %27, %35 : vector<32x8xf32>
    %c0_15 = arith.constant 0 : index
    %c0_16 = arith.constant 0 : index
    %37 = vector.load %arg4[%c0_15, %c0_16] : memref<8x4xf32, #tpu.memory_space<vmem>>, vector<8x4xf32>
    %cst_17 = arith.constant dense<0.000000e+00> : vector<32x4xf32>
    %38 = tpu.matmul %36, %37, %cst_17 {dimension_numbers = #tpu.dot_dimension_numbers<[1], [0], [0], [1], [0, 0, 1, 1], [], []>} : vector<32x8xf32>, vector<8x4xf32>, vector<32x4xf32> -> vector<32x4xf32>
    %c0_18 = arith.constant 0 : index
    %c0_19 = arith.constant 0 : index
    %39 = vector.load %arg5[%c0_18, %c0_19] : memref<32x4xf32, #tpu.memory_space<vmem>>, vector<32x4xf32>
    tpu.vector_store %arg5[%c0_18, %c0_19], %38 {strides = array<i32>} : memref<32x4xf32, #tpu.memory_space<vmem>>, vector<32x4xf32>,
    return
  }
  func.func @transform_0(%arg0: i32) -> (i32, i32, i32) {
    %c0_i32 = arith.constant 0 : i32
    %c0_i32_0 = arith.constant 0 : i32
    %c0_i32_1 = arith.constant 0 : i32
    return %c0_i32, %arg0, %c0_i32_0 : i32, i32, i32
  }
  func.func @transform_1(%arg0: i32) -> (i32, i32) {
    %c0_i32 = arith.constant 0 : i32
    %c0_i32_0 = arith.constant 0 : i32
    %c0_i32_1 = arith.constant 0 : i32
    return %c0_i32, %c0_i32_0 : i32, i32
  }
  func.func @transform_2(%arg0: i32) -> (i32, i32) {
    %c0_i32 = arith.constant 0 : i32
    %c0_i32_0 = arith.constant 0 : i32
    %c0_i32_1 = arith.constant 0 : i32
    return %c0_i32, %c0_i32_0 : i32, i32
  }
  func.func @transform_3(%arg0: i32) -> (i32, i32) {
    %c0_i32 = arith.constant 0 : i32
    %c0_i32_0 = arith.constant 0 : i32
    %c0_i32_1 = arith.constant 0 : i32
    return %c0_i32, %c0_i32_0 : i32, i32
  }
  func.func @transform_4(%arg0: i32) -> (i32, i32) {
    %c0_i32 = arith.constant 0 : i32
    %c0_i32_0 = arith.constant 0 : i32
    return %arg0, %c0_i32 : i32, i32
  }
}

</mosaic_0001>

<llo_original>
// kernel: transition_pallas.1
$region0: #{transition_pallas.1}
  #allocation0 [shape = 'u32[]', space=smem, size = 0x4, offset = 0x4, fixed_abs, tag = 'smem constant byte address 0x4 - core index']
  #allocation1 [shape = 'u32[144,128]{1,0:T(1,128)}', space=vmem, size = 0x12000, scoped, tag = 'internal scratch']
  %s0 = inlined_call_operand.vmem [shape: f32[4,128,8], index: 0, kind: input, shape index: {}]
  %s1 = inlined_call_operand.vmem [shape: f32[1,8], index: 1, kind: input, shape index: {}]
  %s2 = inlined_call_operand.vmem [shape: f32[1,8], index: 2, kind: input, shape index: {}]
  %s3 = inlined_call_operand.vmem [shape: f32[8,4], index: 3, kind: input, shape index: {}]
  %s4 = inlined_call_operand.vmem [shape: f32[128,4], index: 4, kind: output, shape index: {}]
  %s5 = sld [smem:[#allocation0]]
  $region87: #{transition_pallas.1} parent=0
    _
  %s7 = ssub.s32 1, %s5
  %s8 = scalar_select 0, %s7, %s5
  $region1: #{transition_pallas.1} parent=0
    #allocation2 [shape = 'u8[131072]{0}', space=vmem, size = 0x20000, scoped, tag = 'input window, operand 0']
    loop: start=0, step=1, limit=6
    $region2: #{transition_pallas.1} parent=1 // loop_pre_header
      _
    $region3: #{transition_pallas.1} parent=1 // loop_header
      %s10 = sphi 0, %s14
      %p11 = scmp.ge.s32.totalorder %s10, 6
      %s20 = sphi 0, %s22
      %s23 = sphi 0, %s20
      %s24 = sphi 0, %s23
      %s40 = sphi 0, %s24
      %s44 = sphi 0, %s44
      %s46 = sphi 0, %s44
      %s47 = sphi 0, %s46
      %s61 = sphi 0, %s47
      %s65 = sphi 0, %s65
      %s67 = sphi 0, %s65
      %s68 = sphi 0, %s67
      %s82 = sphi 0, %s68
      %s86 = sphi 0, %s86
      %s88 = sphi 0, %s86
      %s89 = sphi 0, %s88
      %s103 = sphi 0, %s89
      %s109 = sphi 0, %s111
      %s112 = sphi 0, %s109
      %s113 = sphi 0, %s112
      %s129 = sphi 0, %s113
    $region4: #{transition_pallas.1} parent=1 // loop_header_branch
      %13 = sbr.rel (%p11) target = $region8
    $region5: #{transition_pallas.1} parent=1 // loop_body
      %s15 = ssub.s32 %s10, 1
      %s16 = ssub.s32 %s10, 2
      %s17 = sadd.s32 %s10, 1
      %s18 = ssub.s32 %s10, %s17
      %p19 = scmp.eq.s32.totalorder %s18, 0
      %s21 = sadd.s32 %s20, 1
      %s22 = scalar_select %p19, %s20, %s21
      %p25 = pneg %p19
      %p26 = scmp.eq.s32.totalorder %s10, 3
      %p27 = por %p25, %p26
      %p28 = scmp.ne.s32.totalorder %s20, %s23
      %p29 = scmp.eq.s32.totalorder %s10, 0
      %p30 = por %p28, %p29
      %p31 = scmp.ne.s32.totalorder %s20, %s23
      %p32 = scmp.eq.s32.totalorder %s15, 3
      %p33 = por %p31, %p32
      %p34 = scmp.ne.s32.totalorder %s23, %s24
      %p35 = scmp.eq.s32.totalorder %s15, 0
      %p36 = por %p34, %p35
      %p37 = scmp.ne.s32.totalorder %s23, %s24
      %p38 = scmp.eq.s32.totalorder %s16, 3
      %p39 = por %p37, %p38
      %p41 = scmp.ne.s32.totalorder %s24, %s40
      %p42 = scmp.eq.s32.totalorder %s16, 0
      %p43 = por %p41, %p42
      %s45 = sadd.s32 %s44, 1
      %p48 = scmp.eq.s32.totalorder %s10, 3
      %p49 = scmp.ne.s32.totalorder %s44, %s46
      %p50 = scmp.eq.s32.totalorder %s10, 0
      %p51 = por %p49, %p50
      %p52 = scmp.ne.s32.totalorder %s44, %s46
      %p53 = scmp.eq.s32.totalorder %s15, 3
      %p54 = por %p52, %p53
      %p55 = scmp.ne.s32.totalorder %s46, %s47
      %p56 = scmp.eq.s32.totalorder %s15, 0
      %p57 = por %p55, %p56
      %p58 = scmp.ne.s32.totalorder %s46, %s47
      %p59 = scmp.eq.s32.totalorder %s16, 3
      %p60 = por %p58, %p59
      %p62 = scmp.ne.s32.totalorder %s47, %s61
      %p63 = scmp.eq.s32.totalorder %s16, 0
      %p64 = por %p62, %p63
      %s66 = sadd.s32 %s65, 1
      %p69 = scmp.eq.s32.totalorder %s10, 3
      %p70 = scmp.ne.s32.totalorder %s65, %s67
      %p71 = scmp.eq.s32.totalorder %s10, 0
      %p72 = por %p70, %p71
      %p73 = scmp.ne.s32.totalorder %s65, %s67
      %p74 = scmp.eq.s32.totalorder %s15, 3
      %p75 = por %p73, %p74
      %p76 = scmp.ne.s32.totalorder %s67, %s68
      %p77 = scmp.eq.s32.totalorder %s15, 0
      %p78 = por %p76, %p77
      %p79 = scmp.ne.s32.totalorder %s67, %s68
      %p80 = scmp.eq.s32.totalorder %s16, 3
      %p81 = por %p79, %p80
      %p83 = scmp.ne.s32.totalorder %s68, %s82
      %p84 = scmp.eq.s32.totalorder %s16, 0
      %p85 = por %p83, %p84
      %s87 = sadd.s32 %s86, 1
      %p90 = scmp.eq.s32.totalorder %s10, 3
      %p91 = scmp.ne.s32.totalorder %s86, %s88
      %p92 = scmp.eq.s32.totalorder %s10, 0
      %p93 = por %p91, %p92
      %p94 = scmp.ne.s32.totalorder %s86, %s88
      %p95 = scmp.eq.s32.totalorder %s15, 3
      %p96 = por %p94, %p95
      %p97 = scmp.ne.s32.totalorder %s88, %s89
      %p98 = scmp.eq.s32.totalorder %s15, 0
      %p99 = por %p97, %p98
      %p100 = scmp.ne.s32.totalorder %s88, %s89
      %p101 = scmp.eq.s32.totalorder %s16, 3
      %p102 = por %p100, %p101
      %p104 = scmp.ne.s32.totalorder %s89, %s103
      %p105 = scmp.eq.s32.totalorder %s16, 0
      %p106 = por %p104, %p105
      %s107 = ssub.s32 %s10, %s17
      %p108 = scmp.eq.s32.totalorder %s107, 0
      %s110 = sadd.s32 %s109, 1
      %s111 = scalar_select %p108, %s109, %s110
      %p114 = pneg %p108
      %p115 = scmp.eq.s32.totalorder %s10, 3
      %p116 = por %p114, %p115
      %p117 = scmp.ne.s32.totalorder %s109, %s112
      %p118 = scmp.eq.s32.totalorder %s10, 0
      %p119 = por %p117, %p118
      %p120 = scmp.ne.s32.totalorder %s109, %s112
      %p121 = scmp.eq.s32.totalorder %s15, 3
      %p122 = por %p120, %p121
      %p123 = scmp.ne.s32.totalorder %s112, %s113
      %p124 = scmp.eq.s32.totalorder %s15, 0
      %p125 = por %p123, %p124
      %p126 = scmp.ne.s32.totalorder %s112, %s113
      %p127 = scmp.eq.s32.totalorder %s16, 3
      %p128 = por %p126, %p127
      %p130 = scmp.ne.s32.totalorder %s113, %s129
      %p131 = scmp.eq.s32.totalorder %s16, 0
      %p132 = por %p130, %p131
      %p133 = scmp.le.s32.totalorder 1, %s10
      %p134 = scmp.lt.s32.totalorder %s10, 5
      %p135 = pnand %p133, %p134
      %p136 = pneg %p135
      // Predicated region
      $region9: #{transition_pallas.1} parent=5 // pred_check
        _
      $region10: #{transition_pallas.1} parent=5 // pred_check_branch
        %138 = sbr.rel (%p135) target = $region12
      $region11: #{transition_pallas.1} parent=5 // pred_region
        %s139 = ssub.s32 %s10, 1
        // Predicated region
        $region13: #{transition_pallas.1} parent=11 // pred_check
          %p140 = pneg %p57
        $region14: #{transition_pallas.1} parent=11 // pred_check_branch
          %142 = sbr.rel (%p140) target = $region16
        $region15: #{transition_pallas.1} parent=11 // pred_region
          _
        $region16: #{transition_pallas.1} parent=11 // pred_fallthru
          _
        // Predicated region
        $region17: #{transition_pallas.1} parent=11 // pred_check
          %p143 = pneg %p78
        $region18: #{transition_pallas.1} parent=11 // pred_check_branch
          %145 = sbr.rel (%p143) target = $region20
        $region19: #{transition_pallas.1} parent=11 // pred_region
          _
        $region20: #{transition_pallas.1} parent=11 // pred_fallthru
          _
        // Predicated region
        $region21: #{transition_pallas.1} parent=11 // pred_check
          %p146 = pneg %p99
        $region22: #{transition_pallas.1} parent=11 // pred_check_branch
          %148 = sbr.rel (%p146) target = $region24
        $region23: #{transition_pallas.1} parent=11 // pred_region
          _
        $region24: #{transition_pallas.1} parent=11 // pred_fallthru
          _
      $region12: #{transition_pallas.1} parent=5 // pred_fallthru
        _
      %p149 = scmp.lt.s32.totalorder %s10, 4
      // Predicated region
      $region25: #{transition_pallas.1} parent=5 // pred_check
        %p150 = pneg %p149
      $region26: #{transition_pallas.1} parent=5 // pred_check_branch
        %152 = sbr.rel (%p150) target = $region28
      $region27: #{transition_pallas.1} parent=5 // pred_region
        // Predicated region
        $region29: #{transition_pallas.1} parent=27 // pred_check
          %p153 = pneg %p30
        $region30: #{transition_pallas.1} parent=27 // pred_check_branch
          %155 = sbr.rel (%p153) target = $region32
        $region31: #{transition_pallas.1} parent=27 // pred_region
          %s156 = sand.u32 %s20, 1
          %s157 = sand.u32 %s20, 1
          %s158 = smul.addr %s157, 128
          %s159 = scalar_lea.vmem [#allocation2], %s158
          %s160 = smul.u32 4, %s10
          %s161 = smul.addr %s160, 8
          %s162 = scalar_lea.vmem %s0, %s161
          // Predicated region
          $region33: #{transition_pallas.1} parent=31 // pred_check
            _
          $region34: #{transition_pallas.1} parent=31 // pred_check_branch
            %164 = sbr.rel (0) target = $region36
          $region35: #{transition_pallas.1} parent=31 // pred_region
            // Predicated region
            $region37: #{transition_pallas.1} parent=35 // pred_check
              _
            $region38: #{transition_pallas.1} parent=35 // pred_check_branch
              %166 = sbr.rel (0) target = $region40
            $region39: #{transition_pallas.1} parent=35 // pred_region
              // Predicated region
              $region52: #{transition_pallas.1} parent=39 // pred_check
                _
              $region53: #{transition_pallas.1} parent=39 // pred_check_branch
                %211 = sbr.rel (0) target = $region55
              $region54: #{transition_pallas.1} parent=39 // pred_region
                loop: start=0, step=1, limit=1
                $region56: #{transition_pallas.1} parent=54 // loop_pre_header
                  _
                $region57: #{transition_pallas.1} parent=54 // loop_header
                  %s213 = sphi 0, %s217
                  %p214 = scmp.ge.s32.totalorder %s213, 1
                  %s218 = sphi %s162, %s162
                  %s219 = sphi %s159, %s159
                $region58: #{transition_pallas.1} parent=54 // loop_header_branch
                  %216 = sbr.rel (%p214) target = $region62
                $region59: #{transition_pallas.1} parent=54 // loop_body
                  %v220 = vld [vmem:[%s218] sm:$0xff]
                  %221 = vst [vmem:[%s219] sm:$0xff] %v220
                  %v222 = vld [vmem:[%s218 + $0x8] sm:$0xff]
                  %223 = vst [vmem:[%s219 + $0x8] sm:$0xff] %v222
                  %v224 = vld [vmem:[%s218 + $0x10] sm:$0xff]
                  %225 = vst [vmem:[%s219 + $0x10] sm:$0xff] %v224
                  %v226 = vld [vmem:[%s218 + $0x18] sm:$0xff]
                  %227 = vst [vmem:[%s219 + $0x18] sm:$0xff] %v226
                  %v228 = vld [vmem:[%s218 + $0x80] sm:$0xff]
                  %229 = vst [vmem:[%s219 + $0x20] sm:$0xff] %v228
                  %v230 = vld [vmem:[%s218 + $0x88] sm:$0xff]
                  %231 = vst [vmem:[%s219 + $0x28] sm:$0xff] %v230
                  %v232 = vld [vmem:[%s218 + $0x90] sm:$0xff]
                  %233 = vst [vmem:[%s219 + $0x30] sm:$0xff] %v232
                  %v234 = vld [vmem:[%s218 + $0x98] sm:$0xff]
                  %235 = vst [vmem:[%s219 + $0x38] sm:$0xff] %v234
                  %v236 = vld [vmem:[%s218 + $0x100] sm:$0xff]
                  %237 = vst [vmem:[%s219 + $0x40] sm:$0xff] %v236
                  %v238 = vld [vmem:[%s218 + $0x108] sm:$0xff]
                  %239 = vst [vmem:[%s219 + $0x48] sm:$0xff] %v238
                  %v240 = vld [vmem:[%s218 + $0x110] sm:$0xff]
                  %241 = vst [vmem:[%s219 + $0x50] sm:$0xff] %v240
                  %v242 = vld [vmem:[%s218 + $0x118] sm:$0xff]
                  %243 = vst [vmem:[%s219 + $0x58] sm:$0xff] %v242
                  %v244 = vld [vmem:[%s218 + $0x180] sm:$0xff]
                  %245 = vst [vmem:[%s219 + $0x60] sm:$0xff] %v244
                  %v246 = vld [vmem:[%s218 + $0x188] sm:$0xff]
                  %247 = vst [vmem:[%s219 + $0x68] sm:$0xff] %v246
                  %v248 = vld [vmem:[%s218 + $0x190] sm:$0xff]
                  %249 = vst [vmem:[%s219 + $0x70] sm:$0xff] %v248
                  %v250 = vld [vmem:[%s218 + $0x198] sm:$0xff]
                  %251 = vst [vmem:[%s219 + $0x78] sm:$0xff] %v250
                $region60: #{transition_pallas.1} parent=54 // loop_footer
                  %s217 = sadd.s32 1, %s213
                $region61: #{transition_pallas.1} parent=54 // loop_footer_branch
                  %212 = sbr.rel target = $region57
                $region62: #{transition_pallas.1} parent=54 // loop_exit
                  _
              $region55: #{transition_pallas.1} parent=39 // pred_fallthru
                _
              // Predicated region
              $region63: #{transition_pallas.1} parent=39 // pred_check
                _
              $region64: #{transition_pallas.1} parent=39 // pred_check_branch
                %253 = sbr.rel target = $region66
              $region65: #{transition_pallas.1} parent=39 // pred_region
                _
              $region66: #{transition_pallas.1} parent=39 // pred_fallthru
                _
            $region40: #{transition_pallas.1} parent=35 // pred_fallthru
              _
            // Predicated region
            $region41: #{transition_pallas.1} parent=35 // pred_check
              _
            $region42: #{transition_pallas.1} parent=35 // pred_check_branch
              %168 = sbr.rel target = $region44
            $region43: #{transition_pallas.1} parent=35 // pred_region
              loop: start=0, step=1, limit=1
              $region45: #{transition_pallas.1} parent=43 // loop_pre_header
                _
              $region46: #{transition_pallas.1} parent=43 // loop_header
                %s171 = sphi 0, %s175
                %p172 = scmp.ge.s32.totalorder %s171, 1
                %s176 = sphi %s162, %s162
                %s177 = sphi %s159, %s159
              $region47: #{transition_pallas.1} parent=43 // loop_header_branch
                %174 = sbr.rel (%p172) target = $region51
              $region48: #{transition_pallas.1} parent=43 // loop_body
                %v178 = vld [vmem:[%s176] sm:$0xff]
                %179 = vst [vmem:[%s177] sm:$0xff] %v178
                %v180 = vld [vmem:[%s176 + $0x8] sm:$0xff]
                %181 = vst [vmem:[%s177 + $0x8] sm:$0xff] %v180
                %v182 = vld [vmem:[%s176 + $0x10] sm:$0xff]
                %183 = vst [vmem:[%s177 + $0x10] sm:$0xff] %v182
                %v184 = vld [vmem:[%s176 + $0x18] sm:$0xff]
                %185 = vst [vmem:[%s177 + $0x18] sm:$0xff] %v184
                %v186 = vld [vmem:[%s176 + $0x80] sm:$0xff]
                %187 = vst [vmem:[%s177 + $0x20] sm:$0xff] %v186
                %v188 = vld [vmem:[%s176 + $0x88] sm:$0xff]
                %189 = vst [vmem:[%s177 + $0x28] sm:$0xff] %v188
                %v190 = vld [vmem:[%s176 + $0x90] sm:$0xff]
                %191 = vst [vmem:[%s177 + $0x30] sm:$0xff] %v190
                %v192 = vld [vmem:[%s176 + $0x98] sm:$0xff]
                %193 = vst [vmem:[%s177 + $0x38] sm:$0xff] %v192
                %v194 = vld [vmem:[%s176 + $0x100] sm:$0xff]
                %195 = vst [vmem:[%s177 + $0x40] sm:$0xff] %v194
                %v196 = vld [vmem:[%s176 + $0x108] sm:$0xff]
                %197 = vst [vmem:[%s177 + $0x48] sm:$0xff] %v196
                %v198 = vld [vmem:[%s176 + $0x110] sm:$0xff]
                %199 = vst [vmem:[%s177 + $0x50] sm:$0xff] %v198
                %v200 = vld [vmem:[%s176 + $0x118] sm:$0xff]
                %201 = vst [vmem:[%s177 + $0x58] sm:$0xff] %v200
                %v202 = vld [vmem:[%s176 + $0x180] sm:$0xff]
                %203 = vst [vmem:[%s177 + $0x60] sm:$0xff] %v202
                %v204 = vld [vmem:[%s176 + $0x188] sm:$0xff]
                %205 = vst [vmem:[%s177 + $0x68] sm:$0xff] %v204
                %v206 = vld [vmem:[%s176 + $0x190] sm:$0xff]
                %207 = vst [vmem:[%s177 + $0x70] sm:$0xff] %v206
                %v208 = vld [vmem:[%s176 + $0x198] sm:$0xff]
                %209 = vst [vmem:[%s177 + $0x78] sm:$0xff] %v208
              $region49: #{transition_pallas.1} parent=43 // loop_footer
                %s175 = sadd.s32 1, %s171
              $region50: #{transition_pallas.1} parent=43 // loop_footer_branch
                %170 = sbr.rel target = $region46
              $region51: #{transition_pallas.1} parent=43 // loop_exit
                _
            $region44: #{transition_pallas.1} parent=35 // pred_fallthru
              _
          $region36: #{transition_pallas.1} parent=31 // pred_fallthru
            _
          %254 = vnop
        $region32: #{transition_pallas.1} parent=27 // pred_fallthru
          _
      $region28: #{transition_pallas.1} parent=5 // pred_fallthru
        _
      %p255 = scmp.le.s32.totalorder 1, %s10
      %p256 = scmp.lt.s32.totalorder %s10, 5
      %p257 = pnand %p255, %p256
      %p258 = pneg %p257
      // Predicated region
      $region67: #{transition_pallas.1} parent=5 // pred_check
        _
      $region68: #{transition_pallas.1} parent=5 // pred_check_branch
        %260 = sbr.rel (%p257) target = $region70
      $region69: #{transition_pallas.1} parent=5 // pred_region
        %s261 = ssub.s32 %s10, 1
        %s262 = sand.u32 %s23, 1
        %s263 = sand.u32 %s23, 1
        %s264 = smul.addr %s263, 128
        %s265 = scalar_lea.vmem [#allocation2], %s264
        // Predicated region
        $region71: #{transition_pallas.1} parent=69 // pred_check
          %p266 = pneg %p36
        $region72: #{transition_pallas.1} parent=69 // pred_check_branch
          %268 = sbr.rel (%p266) target = $region74
        $region73: #{transition_pallas.1} parent=69 // pred_region
          _
        $region74: #{transition_pallas.1} parent=69 // pred_fallthru
          _
        %s269 = sand.u32 %s23, 1
        %s270 = sand.u32 %s23, 1
        %s271 = smul.addr %s270, 128
        %s272 = scalar_lea.vmem [#allocation2], %s271
        %p273 = pneg %p36
        %p274 = pneg %p33
        %p275 = pneg %p57
        %p276 = pneg %p54
        %p277 = pneg %p78
        %p278 = pneg %p75
        %p279 = pneg %p99
        %p280 = pneg %p96
        %p281 = pneg %p125
        %p282 = pneg %p122
        %s283 = smul.u32 4, %s15
        %p284 = scmp.lt.s32.totalorder %s283, 15
        %s285 = scalar_select %p284, %s283, 15
        %s286 = smul.addr %s285, 8
        %s287 = scalar_lea.vmem %s4, %s286
        %s288 = smul.u32 4, %s15
        %s289 = smul.u32 4, %s15
        %p290 = scmp.lt.s32.totalorder %s289, 15
        %s291 = scalar_select %p290, %s289, 15
        %s292 = smul.addr %s291, 8
        %s293 = scalar_lea.vmem %s4, %s292
        %s294 = smul.u32 4, %s15
        %v295 = vld [vmem:[%s1] sm:$0x1]
        %v296 = vld [vmem:[%s2] sm:$0x1]
        %v297 = vld [vmem:[%s265] sm:$0xff]
        %v298 = vld [vmem:[%s265 + $0x8] sm:$0xff]
        %v299 = vld [vmem:[%s265 + $0x10] sm:$0xff]
        %v300 = vld [vmem:[%s265 + $0x18] sm:$0xff]
        %v302 = vlaneseq
        %v303 = vshrl.u32 %v302, 7
        %v304 = vsub.s32 0, %v303
        %v305 = vrot.slane %v295, %v304
        %v307 = vmul.f32 %v297, %v305
        %v308 = vmul.f32 %v298, %v305
        %v309 = vmul.f32 %v299, %v305
        %v310 = vmul.f32 %v300, %v305
        %v312 = vlaneseq
        %v313 = vshrl.u32 %v312, 7
        %v314 = vsub.s32 0, %v313
        %v315 = vrot.slane %v296, %v314
        %v317 = vadd.f32 %v307, %v315
        %v318 = vadd.f32 %v308, %v315
        %v319 = vadd.f32 %v309, %v315
        %v320 = vadd.f32 %v310, %v315
        %v321 = vmax.f32 %v317, 0.0
        %v322 = vmax.f32 %v318, 0.0
        %v323 = vmax.f32 %v319, 0.0
        %v324 = vmax.f32 %v320, 0.0
        %s325 = scalar_lea.vmem %s265, 32 [#allocation2]
        %v326 = vld [vmem:[%s325] sm:$0xff]
        %v327 = vld [vmem:[%s325 + $0x8] sm:$0xff]
        %v328 = vld [vmem:[%s325 + $0x10] sm:$0xff]
        %v329 = vld [vmem:[%s325 + $0x18] sm:$0xff]
        %v330 = vmul.f32 %v326, %v305
        %v331 = vmul.f32 %v327, %v305
        %v332 = vmul.f32 %v328, %v305
        %v333 = vmul.f32 %v329, %v305
        %v334 = vadd.f32 %v330, %v315
        %v335 = vadd.f32 %v331, %v315
        %v336 = vadd.f32 %v332, %v315
        %v337 = vadd.f32 %v333, %v315
        %v338 = vmax.f32 %v334, 0.0
        %v339 = vmax.f32 %v335, 0.0
        %v340 = vmax.f32 %v336, 0.0
        %v341 = vmax.f32 %v337, 0.0
        %v342 = vadd.f32 %v321, %v338
        %v343 = vadd.f32 %v322, %v339
        %v344 = vadd.f32 %v323, %v340
        %v345 = vadd.f32 %v324, %v341
        %s346 = scalar_lea.vmem %s265, 64 [#allocation2]
        %v347 = vld [vmem:[%s346] sm:$0xff]
        %v348 = vld [vmem:[%s346 + $0x8] sm:$0xff]
        %v349 = vld [vmem:[%s346 + $0x10] sm:$0xff]
        %v350 = vld [vmem:[%s346 + $0x18] sm:$0xff]
        %v351 = vmul.f32 %v347, %v305
        %v352 = vmul.f32 %v348, %v305
        %v353 = vmul.f32 %v349, %v305
        %v354 = vmul.f32 %v350, %v305
        %v355 = vadd.f32 %v351, %v315
        %v356 = vadd.f32 %v352, %v315
        %v357 = vadd.f32 %v353, %v315
        %v358 = vadd.f32 %v354, %v315
        %v359 = vmax.f32 %v355, 0.0
        %v360 = vmax.f32 %v356, 0.0
        %v361 = vmax.f32 %v357, 0.0
        %v362 = vmax.f32 %v358, 0.0
        %v363 = vadd.f32 %v342, %v359
        %v364 = vadd.f32 %v343, %v360
        %v365 = vadd.f32 %v344, %v361
        %v366 = vadd.f32 %v345, %v362
        %s367 = scalar_lea.vmem %s265, 96 [#allocation2]
        %v368 = vld [vmem:[%s367] sm:$0xff]
        %v369 = vld [vmem:[%s367 + $0x8] sm:$0xff]
        %v370 = vld [vmem:[%s367 + $0x10] sm:$0xff]
        %v371 = vld [vmem:[%s367 + $0x18] sm:$0xff]
        %v372 = vmul.f32 %v368, %v305
        %v373 = vmul.f32 %v369, %v305
        %v374 = vmul.f32 %v370, %v305
        %v375 = vmul.f32 %v371, %v305
        %v376 = vadd.f32 %v372, %v315
        %v377 = vadd.f32 %v373, %v315
        %v378 = vadd.f32 %v374, %v315
        %v379 = vadd.f32 %v375, %v315
        %v380 = vmax.f32 %v376, 0.0
        %v381 = vmax.f32 %v377, 0.0
        %v382 = vmax.f32 %v378, 0.0
        %v383 = vmax.f32 %v379, 0.0
        %v384 = vadd.f32 %v363, %v380
        %v385 = vadd.f32 %v364, %v381
        %v386 = vadd.f32 %v365, %v382
        %v387 = vadd.f32 %v366, %v383
        %v388 = vld [vmem:[%s3] sm:$0xff]
        %vm389 = vcmask 64512
        %v391 = vsel %vm389, %v384, 0
        %v394 = vsel %vm389, %v385, 0
        %v397 = vsel %vm389, %v386, 0
        %v400 = vsel %vm389, %v387, 0
        %402 = vmatprep.subr.mxu0 0.0
        %403 = vmatpush1.msra.mxu0 %v388
        %404 = vmatprep.subr.mxu0 0.0
        %405 = vmatpush1.msra.mxu0 0.0
        %406 = vmatprep.subr.mxu0 0.0
        %407 = vmatpush1.msra.mxu0 0.0
        %408 = vmatprep.subr.mxu0 0.0
        %409 = vmatpush1.msra.mxu0 0.0
        %410 = vmatprep.subr.mxu0 0.0
        %411 = vmatpush1.msra.mxu0 0.0
        %412 = vmatprep.subr.mxu0 0.0
        %413 = vmatpush1.msra.mxu0 0.0
        %414 = vmatprep.subr.mxu0 0.0
        %415 = vmatpush1.msra.mxu0 0.0
        %416 = vmatprep.subr.mxu0 0.0
        %417 = vmatpush1.msra.mxu0 0.0
        %418 = vmatprep.subr.mxu0 0.0
        %419 = vmatpush1.msra.mxu0 0.0
        %420 = vmatprep.subr.mxu0 0.0
        %421 = vmatpush1.msra.mxu0 0.0
        %422 = vmatprep.subr.mxu0 0.0
        %423 = vmatpush1.msra.mxu0 0.0
        %424 = vmatprep.subr.mxu0 0.0
        %425 = vmatpush1.msra.mxu0 0.0
        %426 = vmatprep.subr.mxu0 0.0
        %427 = vmatpush1.msra.mxu0 0.0
        %428 = vmatprep.subr.mxu0 0.0
        %429 = vmatpush1.msra.mxu0 0.0
        %430 = vmatprep.subr.mxu0 0.0
        %431 = vmatpush1.msra.mxu0 0.0
        %432 = vmatprep.subr.mxu0 0.0
        %433 = vmatpush1.msra.mxu0 0.0
        %434 = vmatprep.subr.mxu0 0.0
        %435 = vmatpush1.msra.mxu0 0.0
        %436 = vmatprep.subr.mxu0 0.0
        %437 = vmatpush1.msra.mxu0 0.0
        %438 = vmatprep.subr.mxu0 0.0
        %439 = vmatpush1.msra.mxu0 0.0
        %440 = vmatprep.subr.mxu0 0.0
        %441 = vmatpush1.msra.mxu0 0.0
        %442 = vmatprep.subr.mxu0 0.0
        %443 = vmatpush1.msra.mxu0 0.0
        %444 = vmatprep.subr.mxu0 0.0
        %445 = vmatpush1.msra.mxu0 0.0
        %446 = vmatprep.subr.mxu0 0.0
        %447 = vmatpush1.msra.mxu0 0.0
        %448 = vmatprep.subr.mxu0 0.0
        %449 = vmatpush1.msra.mxu0 0.0
        %450 = vmatprep.subr.mxu0 0.0
        %451 = vmatpush1.msra.mxu0 0.0
        %452 = vmatprep.subr.mxu0 0.0
        %453 = vmatpush1.msra.mxu0 0.0
        %454 = vmatprep.subr.mxu0 0.0
        %455 = vmatpush1.msra.mxu0 0.0
        %456 = vmatprep.subr.mxu0 0.0
        %457 = vmatpush1.msra.mxu0 0.0
        %458 = vmatprep.subr.mxu0 0.0
        %459 = vmatpush1.msra.mxu0 0.0
        %460 = vmatprep.subr.mxu0 0.0
        %461 = vmatpush1.msra.mxu0 0.0
        %462 = vmatprep.subr.mxu0 0.0
        %463 = vmatpush1.msra.mxu0 0.0
        %464 = vmatprep.subr.mxu0 0.0
        %465 = vmatpush1.msra.mxu0 0.0
        %466 = vmatprep.mubr.f32.mxu0 0.0
        %467 = vmatmul.mubr.f32.gmra.mrb[0].mxu0 %v391
        %v468 = vpop.f32.mrb[0].mxu0
        %v469 = vadd.f32 0.0, %v468
        %v470 = vpop.f32.mrb[0].mxu0
        %471 = vmatprep.mubr.f32.mxu0 0.0
        %472 = vmatmul.mubr.f32.gmra.mrb[0].mxu0 %v394
        %v473 = vpop.f32.mrb[0].mxu0
        %v474 = vadd.f32 0.0, %v473
        %v475 = vpop.f32.mrb[0].mxu0
        %476 = vmatprep.mubr.f32.mxu0 0.0
        %477 = vmatmul.mubr.f32.gmra.mrb[0].mxu0 %v397
        %v478 = vpop.f32.mrb[0].mxu0
        %v479 = vadd.f32 0.0, %v478
        %v480 = vpop.f32.mrb[0].mxu0
        %481 = vmatprep.mubr.f32.mxu0 0.0
        %482 = vmatmul.mubr.f32.gmra.mrb[0].mxu0 %v400
        %v483 = vpop.f32.mrb[0].mxu0
        %v484 = vadd.f32 0.0, %v483
        %v485 = vpop.f32.mrb[0].mxu0
        %486 = vdwg.mxu0
        %vm487 = vcmask 31744
        %488 = vst.msk [vmem:[%s293] sm:$0xff] %vm487, %v469
        %489 = vst.msk [vmem:[%s293 + $0x8] sm:$0xff] %vm487, %v474
        %490 = vst.msk [vmem:[%s293 + $0x10] sm:$0xff] %vm487, %v479
        %491 = vst.msk [vmem:[%s293 + $0x18] sm:$0xff] %vm487, %v484
        %s492 = smul.u32 4, %s15
        %p493 = scmp.lt.s32.totalorder %s492, 15
        %s494 = scalar_select %p493, %s492, 15
        %s495 = smul.addr %s494, 8
        %s496 = scalar_lea.vmem %s4, %s495
        // Predicated region
        $region75: #{transition_pallas.1} parent=69 // pred_check
          %p497 = pneg %p122
        $region76: #{transition_pallas.1} parent=69 // pred_check_branch
          %499 = sbr.rel (%p497) target = $region78
        $region77: #{transition_pallas.1} parent=69 // pred_region
          %s500 = smul.u32 4, %s15
        $region78: #{transition_pallas.1} parent=69 // pred_fallthru
          _
      $region70: #{transition_pallas.1} parent=5 // pred_fallthru
        _
      %p501 = scmp.le.s32.totalorder 2, %s10
      // Predicated region
      $region79: #{transition_pallas.1} parent=5 // pred_check
        %p502 = pneg %p501
      $region80: #{transition_pallas.1} parent=5 // pred_check_branch
        %504 = sbr.rel (%p502) target = $region82
      $region81: #{transition_pallas.1} parent=5 // pred_region
        %s505 = ssub.s32 %s10, 2
        // Predicated region
        $region83: #{transition_pallas.1} parent=81 // pred_check
          %p506 = pneg %p128
        $region84: #{transition_pallas.1} parent=81 // pred_check_branch
          %508 = sbr.rel (%p506) target = $region86
        $region85: #{transition_pallas.1} parent=81 // pred_region
          %s509 = smul.u32 4, %s16
          %p510 = scmp.lt.s32.totalorder %s509, 15
          %s511 = scalar_select %p510, %s509, 15
          %s512 = smul.addr %s511, 8
          %s513 = scalar_lea.vmem %s4, %s512
        $region86: #{transition_pallas.1} parent=81 // pred_fallthru
          _
      $region82: #{transition_pallas.1} parent=5 // pred_fallthru
        _
    $region6: #{transition_pallas.1} parent=1 // loop_footer
      %s14 = sadd.s32 1, %s10
    $region7: #{transition_pallas.1} parent=1 // loop_footer_branch
      %9 = sbr.rel target = $region3
    $region8: #{transition_pallas.1} parent=1 // loop_exit
      _

</llo_original>
